<compile_context>
chip_gen: v5e
topology: v5e:2x2
jax: 0.10.0
libtpu: 0.0.40
codegen_flags: <defaults>
</compile_context>

<pallas_src>
import functools
import math

import jax
import jax.numpy as jnp
from jax import lax
from jax.experimental import pallas as pl
from jax.experimental.pallas import tpu as pltpu


@functools.lru_cache(maxsize=None)
def _roll_matches_numpy() -> bool:
    """Probe pltpu.roll's rotation direction once with a tiny kernel.

    np.roll convention: out[i] = x[i - shift].  The wrap-masks in the main
    kernel depend on the direction, so probe instead of assuming."""
    x = jnp.arange(8 * 128, dtype=jnp.float32).reshape(8, 128)

    def k(x_ref, o_ref):
        o_ref[...] = pltpu.roll(x_ref[...], 1, 1)

    y = pl.pallas_call(k, out_shape=jax.ShapeDtypeStruct((8, 128), jnp.float32))(x)
    return bool(y[0, 0] == 127.0)


def _frs_kernel(x_ref, x_hbm, purity_ref, uncert_ref, lo_ref, hi_ref, sem,
                *, num_classes, size, d_total, d_block, h, w, roll_like_np):
    C = num_classes
    pad = size // 2
    tD = d_block
    tDh = tD + 2 * pad
    L = h * w
    inv_log_c = 1.0 / math.log(C)

    i = pl.program_id(0)
    d0 = i * tD

    # ---- kick off the small D-halo DMAs; overlapped with center compute ----
    lo_start = jnp.maximum(d0 - pad, 0)            # clamped; invalid planes masked later
    hi_start = jnp.minimum(d0 + tD, d_total - pad)
    lo_cp = pltpu.make_async_copy(x_hbm.at[:, pl.ds(lo_start, pad), :], lo_ref, sem.at[0])
    hi_cp = pltpu.make_async_copy(x_hbm.at[:, pl.ds(hi_start, pad), :], hi_ref, sem.at[1])
    lo_cp.start()
    hi_cp.start()

    def per_plane(xb):
        """(C, n, L) logits -> (pixel_entropy (n, L) f32, argmax channel (n, L) i32).

        Single streaming pass over channels: one exp per channel and a single
        log per voxel (analytic -sum p log p = log(sum e^u) - sum u e^u / sum e^u);
        argmax fused via equality-with-max (first max wins, like torch/jnp)."""
        m = jnp.max(xb, axis=0)
        s = jnp.zeros_like(m)
        t = jnp.zeros_like(m)
        best = jnp.full(m.shape, C, jnp.int32)
        for c in range(C):
            u = xb[c] - m
            e = jnp.exp(u)
            s = s + e
            t = t + e * u
            best = jnp.minimum(best, jnp.where(xb[c] == m, c, C))
        ent = (jnp.log(s) - t / s) * inv_log_c
        return ent, best

    ent_c, best_c = per_plane(x_ref[...])          # center slab (halo DMA in flight)
    lo_cp.wait()
    hi_cp.wait()
    ent_lo, best_lo = per_plane(lo_ref[...])
    ent_hi, best_hi = per_plane(hi_ref[...])

    ent = jnp.concatenate([ent_lo, ent_c, ent_hi], axis=0)       # (tDh, L)
    best = jnp.concatenate([best_lo, best_c, best_hi], axis=0)   # (tDh, L)

    # Mask halo planes that fall outside the global D extent (zero padding).
    gd = d0 - pad + lax.broadcasted_iota(jnp.int32, (tDh, L), 0)
    valid = (gd >= 0) & (gd < d_total)
    ent = jnp.where(valid, ent, 0.0)
    best = jnp.where(valid, best, -1)

    # Boundary masks for the lane-rolled H/W shifts (hoisted out of all loops).
    col = lax.broadcasted_iota(jnp.int32, (tD, L), 1) % w
    row = lax.broadcasted_iota(jnp.int32, (tD, L), 1) // w
    wmasks, hmasks = [], []
    for off in range(1, pad + 1):
        wmasks.append(((col >= off).astype(jnp.float32),
                       (col < w - off).astype(jnp.float32)))
        hmasks.append(((row >= off).astype(jnp.float32),
                       (row < h - off).astype(jnp.float32)))

    rsign = 1 if roll_like_np else -1

    def shift(q, s):
        # circular lane shift such that out[l] = q[l + s]; caller masks the wrap.
        return pltpu.roll(q, (-s * rsign) % L, 1)

    def box_d(q):
        """(tDh, L) -> (tD, L): zero-padded all-ones box sum along D (halo'd)."""
        acc = q[pad:pad + tD]
        for off in range(1, pad + 1):
            acc = acc + q[pad - off:pad - off + tD] + q[pad + off:pad + off + tD]
        return acc

    def box_hw(q):
        """(tD, L) -> (tD, L): zero-padded box sums along W then H (masked XLU rolls)."""
        aw = q
        for off in range(1, pad + 1):
            aw = aw + wmasks[off - 1][0] * shift(q, -off) \
                    + wmasks[off - 1][1] * shift(q, off)
        a = aw
        for off in range(1, pad + 1):
            a = a + hmasks[off - 1][0] * shift(aw, -off * w) \
                  + hmasks[off - 1][1] * shift(aw, off * w)
        return a

    region_ent = box_hw(box_d(ent))
    # count == sum_c purity_conv(one_hot)_c == box3(validity): purely geometric.
    count = box_hw(box_d(valid.astype(jnp.float32)))
    inv_count = 1.0 / count                        # one divide, reused below

    # Stream channels: never materialize the (C, D, H, W) summary / dist tensors.
    # Last channel's box sum = count - sum(others)  (exact for small-int f32),
    # which saves one full box filter per voxel.
    imp = jnp.zeros((tD, L), jnp.float32)
    partial = jnp.zeros((tD, L), jnp.float32)
    for c in range(C):
        if c < C - 1:
            box_c = box_hw(box_d((best == c).astype(jnp.float32)))
            partial = partial + box_c
        else:
            box_c = count - partial
        dist = box_c * inv_count
        imp = imp - dist * jnp.log(dist + 1e-6)

    purity_ref[...] = imp * inv_log_c              # lane-dense (tD, H*W) stores
    uncert_ref[...] = region_ent * inv_count


def _pick_d_block(C, D, L, vmem_budget_bytes=24 * 2 ** 20):
    """Largest D-slab that divides D, is 8-aligned (or == D) and fits a
    conservative VMEM budget, preferring >= 2 slabs (megacore sharding)."""
    per_plane = 4 * L * (2 * C + 4 + 16)   # dbl-buffered input + outputs + temps
    max_td = max(1, vmem_budget_bytes // per_plane)
    cands = [td for td in range(8, D + 1, 8) if D % td == 0]
    if D not in cands:
        cands.append(D)                    # full-extent block is always legal
    feasible = [td for td in cands if td <= max_td] or [min(cands)]
    multi = [td for td in feasible if D // td >= 2]
    return max(multi) if multi else max(feasible)


@functools.partial(jax.jit, static_argnames=("size", "roll_np"))
def _frs_forward(logit, size, roll_np):
    assert logit.ndim == 5 and logit.shape[0] == 1
    assert size % 2 == 1, 'error size'
    x = logit[0]                                   # (C, D, H, W)
    C, D, H, W = x.shape
    pad = size // 2
    L = H * W

    x_flat = x.reshape(C, D, L)                    # lane-dense spatial layout
    tD = _pick_d_block(C, D, L)
    grid = (D // tD,)

    est = 4 * L * ((tD + 2 * pad) * (2 * C + 4 + 16) + 4 * C * pad)
    vmem_limit = int(min(64 * 2 ** 20, max(32 * 2 ** 20, 2 * est)))

    kernel = functools.partial(
        _frs_kernel, num_classes=C, size=size, d_total=D, d_block=tD,
        h=H, w=W, roll_like_np=roll_np)

    out_sd = jax.ShapeDtypeStruct((D, L), jnp.float32)
    impurity, uncertainty = pl.pallas_call(
        kernel,
        grid=grid,
        out_shape=(out_sd, out_sd),
        in_specs=[
            pl.BlockSpec((C, tD, L), lambda i: (0, i, 0)),   # pipelined center slab
            pl.BlockSpec(memory_space=pl.ANY),               # same tensor, halo DMAs
        ],
        out_specs=(
            pl.BlockSpec((tD, L), lambda i: (i, 0)),
            pl.BlockSpec((tD, L), lambda i: (i, 0)),
        ),
        scratch_shapes=[
            pltpu.VMEM((C, pad, L), jnp.float32),            # lower D halo
            pltpu.VMEM((C, pad, L), jnp.float32),            # upper D halo
            pltpu.SemaphoreType.DMA((2,)),
        ],
        compiler_params=pltpu.CompilerParams(
            dimension_semantics=("parallel",),
            vmem_limit_bytes=vmem_limit),
    )(x_flat, x_flat)

    score = impurity * uncertainty                           # fused in XLA, free
    return (score.reshape(D, H, W), impurity.reshape(D, H, W),
            uncertainty.reshape(D, H, W))


def floating_region_score(logit, size: int = 3):
    """logit: (1, C, D, H, W) f32 -> (score, impurity, uncertainty), each (D, H, W)."""
    return _frs_forward(logit, size=size, roll_np=_roll_matches_numpy())


def _reference(logit, size=3):
    """Plain-JAX reference mirroring the PyTorch forward (for validation)."""
    x = logit[0]
    C = x.shape[0]
    log_c = math.log(C)
    p = jax.nn.softmax(x, axis=0)
    pixel_entropy = jnp.sum(-p * jnp.log(p + 1e-6), axis=0) / log_c
    k = jnp.ones((1, 1, size, size, size), jnp.float32)

    def conv3(v):                                  # (D,H,W) -> (D,H,W)
        return lax.conv_general_dilated(v[None, None], k, (1, 1, 1), 'SAME')[0, 0]

    region_sum_entropy = conv3(pixel_entropy)
    predict = jnp.argmax(p, axis=0)
    one_hot = jax.nn.one_hot(predict, C, axis=0, dtype=jnp.float32)
    summary = jax.vmap(conv3)(one_hot)
    count = jnp.sum(summary, axis=0)
    dist = summary / count
    region_impurity = jnp.sum(-dist * jnp.log(dist + 1e-6), axis=0) / log_c
    uncert = region_sum_entropy / count
    return region_impurity * uncert, region_impurity, uncert


if __name__ == "__main__":
    key = jax.random.PRNGKey(0)
    C, D, H, W = 8, 16, 16, 16          # module default in_channels=8; two D-slabs
    logit = jax.random.normal(key, (1, C, D, H, W), dtype=jnp.float32)

    score, purity, uncert = jax.block_until_ready(floating_region_score(logit))

    ref_score, ref_purity, ref_uncert = _reference(logit)
    assert jnp.allclose(purity, ref_purity, atol=1e-3, rtol=1e-3)
    assert jnp.allclose(uncert, ref_uncert, atol=1e-3, rtol=1e-3)
    assert jnp.allclose(score, ref_score, atol=1e-3, rtol=1e-3)

    print("KERNEL_OK")
</pallas_src>

<mosaic_0001>
module attributes {stable_mosaic.version = 11 : i64} {
  func.func @k(%arg0: memref<8x128xf32, #tpu.memory_space<vmem>>, %arg1: memref<8x128xf32, #tpu.memory_space<vmem>>) attributes {dimension_semantics = [], scalar_prefetch = 0 : i64, scratch_operands = 0 : i64, tpu.core_type = #tpu.core_type<tc>} {
    %c0 = arith.constant 0 : index
    %c0_0 = arith.constant 0 : index
    %0 = vector.load %arg0[%c0, %c0_0] : memref<8x128xf32, #tpu.memory_space<vmem>>, vector<8x128xf32>
    %c1_i32 = arith.constant 1 : i32
    %1 = tpu.dynamic_rotate %0 by %c1_i32 dim 1 : vector<8x128xf32>, i32 -> vector<8x128xf32>
    %c0_1 = arith.constant 0 : index
    %c0_2 = arith.constant 0 : index
    %2 = vector.load %arg1[%c0_1, %c0_2] : memref<8x128xf32, #tpu.memory_space<vmem>>, vector<8x128xf32>
    tpu.vector_store %arg1[%c0_1, %c0_2], %1 {strides = array<i32>} : memref<8x128xf32, #tpu.memory_space<vmem>>, vector<8x128xf32>,
    return
  }
}

</mosaic_0001>

<llo_original>
// kernel: tpu_custom_call.1
$region0: #{tpu_custom_call.1}
  #allocation0 [shape = 'u32[]', space=smem, size = 0x4, offset = 0x4, fixed_abs, tag = 'smem constant byte address 0x4 - core index']
  #allocation1 [shape = 'u32[72,128]{1,0:T(1,128)}', space=vmem, size = 0x9000, scoped, tag = 'internal scratch']
  %s0 = inlined_call_operand.hbm [shape: f32[8,128], index: 0, kind: input, shape index: {}]
  %s1 = inlined_call_operand.hbm [shape: f32[8,128], index: 1, kind: output, shape index: {}]
  %s2 = sld [smem:[#allocation0]]
  $region18: #{tpu_custom_call.1} parent=0
    _
  %s4 = ssub.s32 1, %s2
  %s5 = scalar_select 0, %s4, %s2
  $region1: #{tpu_custom_call.1} parent=0
    #allocation2 [shape = 'u8[4096]{0}', space=vmem, size = 0x1000, scoped, tag = 'input window, operand 0, single buffered']
    #allocation3 [shape = 's32[1]{0}', space=sflag, size = 0x4, scoped, tag = 'scoped memory for tpu_custom_call.1']
    #allocation4 [shape = 's32[1]{0}', space=sflag, size = 0x4, scoped, tag = 'scoped memory for tpu_custom_call.1']
    #allocation5 [shape = 'u8[4096]{0}', space=vmem, size = 0x1000, scoped, tag = 'output window, operand 0, single buffered']
    %6 = vsyncpa [#allocation3], 0
    %7 = vsyncpa [#allocation4], 0
    // Predicated region
    $region2: #{tpu_custom_call.1} parent=1 // pred_check
      _
    $region3: #{tpu_custom_call.1} parent=1 // pred_check_branch
      %9 = sbr.rel (0) target = $region5
    $region4: #{tpu_custom_call.1} parent=1 // pred_region
      %11 = vsyncadd [#allocation3], 0
      %s13 = sshll.u32 %s0, 4
      %s14 = int_to_ptr.hbm [resolvable:$true] %s13
      %s15 = sshll.u32 [#allocation2], 4
      %s16 = int_to_ptr.vmem [resolvable:$true] %s15
      %18 = dma.hbm_to_vmem [thread:$0]  %s14, 128, %s16, [#allocation3]
    $region5: #{tpu_custom_call.1} parent=1 // pred_fallthru
      _
    // Predicated region
    $region6: #{tpu_custom_call.1} parent=1 // pred_check
      _
    $region7: #{tpu_custom_call.1} parent=1 // pred_check_branch
      %20 = sbr.rel (0) target = $region9
    $region8: #{tpu_custom_call.1} parent=1 // pred_region
      %22 = dma.done [#allocation3], 128
    $region9: #{tpu_custom_call.1} parent=1 // pred_fallthru
      _
    %v23 = vld [vmem:[#allocation2] sm:$0xff]
    %24 = vrot.lane.b32.xlu0 %v23, 1
    %v25 = vpop.permute.xlu0 %24
    %26 = vst [vmem:[#allocation5] sm:$0xff] %v25
    // Predicated region
    $region10: #{tpu_custom_call.1} parent=1 // pred_check
      _
    $region11: #{tpu_custom_call.1} parent=1 // pred_check_branch
      %28 = sbr.rel (0) target = $region13
    $region12: #{tpu_custom_call.1} parent=1 // pred_region
      %30 = vsyncadd [#allocation4], 0
      %s32 = sshll.u32 [#allocation5], 4
      %s33 = int_to_ptr.vmem [resolvable:$true] %s32
      %s34 = sshll.u32 %s1, 4
      %s35 = int_to_ptr.hbm [resolvable:$true] %s34
      %37 = dma.vmem_to_hbm [thread:$0]  %s33, 128, %s35, [#allocation4]
    $region13: #{tpu_custom_call.1} parent=1 // pred_fallthru
      _
    // Predicated region
    $region14: #{tpu_custom_call.1} parent=1 // pred_check
      _
    $region15: #{tpu_custom_call.1} parent=1 // pred_check_branch
      %39 = sbr.rel (0) target = $region17
    $region16: #{tpu_custom_call.1} parent=1 // pred_region
      %41 = dma.done [#allocation4], 128
    $region17: #{tpu_custom_call.1} parent=1 // pred_fallthru
      _
    %42 = vsyncpa [#allocation3], 1
    %43 = vsyncpa [#allocation4], 1

</llo_original>
